<compile_context>
chip_gen: v5e
topology: v5e:2x2
jax: 0.10.0
libtpu: 0.0.40
codegen_flags: <defaults>
</compile_context>

<pallas_src>
import jax
import jax.numpy as jnp
from jax.experimental import pallas as pl
from jax.experimental.pallas import tpu as pltpu


def _round_up(n, m):
    return ((n + m - 1) // m) * m


def _vmem_budget_bytes():
    """Generation-aware VMEM budget (~75% of per-core physical VMEM)."""
    try:
        cap = int(pltpu.get_tpu_info().vmem_capacity_bytes)
    except Exception:
        cap = 64 * 1024 * 1024  # conservative fallback: v7x per-TensorCore VMEM
    return max(32 * 1024 * 1024, (cap * 3) // 4)


def _make_kernel(n_tiles):
    if n_tiles == 1:
        def kernel(x_ref, w_ref, b_ref, o_ref):
            # x_ref: (TM, D) row tile; w_ref: (D, D) resident bf16 weight;
            # b_ref: (1, D) f32 bias; o_ref: (TM, D) output tile.
            x = x_ref[...]
            y = jnp.dot(x.astype(jnp.bfloat16), w_ref[...],
                        preferred_element_type=jnp.float32)
            o_ref[...] = (y + b_ref[...] + x.astype(jnp.float32)).astype(o_ref.dtype)
    else:
        def kernel(x_ref, xres_ref, w_ref, b_ref, o_ref):
            # x_ref: (TM, D) full row tile (resident across the N sweep);
            # xres_ref: (TM, TN) residual columns matching this W strip;
            # w_ref: (D, TN) weight strip; b_ref: (1, TN); o_ref: (TM, TN).
            y = jnp.dot(x_ref[...].astype(jnp.bfloat16), w_ref[...],
                        preferred_element_type=jnp.float32)
            o_ref[...] = (y + b_ref[...]
                          + xres_ref[...].astype(jnp.float32)).astype(o_ref.dtype)
    return kernel


def residual_linear(x, w, b, *, row_block=None, target_step_bytes=4 * 1024 * 1024):
    """Residual(Linear): (B, L, D) -> (B, L, D), computes x @ w + b + x.

    Pass `w` pre-cast to bf16 and `b` pre-cast to f32 so the parameter casts
    stay out of the per-call path (a fallback cast is applied only if needed).
    """
    B, L, D = x.shape
    rows = B * L
    out_dtype = x.dtype
    x_b = x.dtype.itemsize
    o_b = jnp.dtype(out_dtype).itemsize

    # Parameters in the dtype the kernel consumes (no-ops if pre-cast).
    w_bf16 = w if w.dtype == jnp.bfloat16 else w.astype(jnp.bfloat16)
    b_f32 = (b if b.dtype == jnp.float32 else b.astype(jnp.float32)).reshape(1, D)

    budget = _vmem_budget_bytes()
    sub = 16 if x_b <= 2 else 8  # sublane packing of the streamed dtype

    # --- N (output column) tiling of W: keep the double-buffered bf16 strip
    # under ~half the VMEM budget; tn always divides D and stays lane-aligned.
    tn = D
    if D % 128 == 0:
        while (4 * D * tn) > budget // 2 and tn % 2 == 0 and (tn // 2) % 128 == 0:
            tn //= 2
    n_tiles = pl.cdiv(D, tn)
    # TODO(synk): if even a (D, 128) strip of W cannot fit in VMEM, a K grid
    # axis with an f32 accumulator + pl.when init/finalize is needed; not fused.

    def _vmem_bytes(tm_):
        x_tiles = 2 * tm_ * D * x_b                     # double-buffered x tile
        xres = 2 * tm_ * tn * x_b if n_tiles > 1 else 0  # residual column tile
        o_tiles = 2 * tm_ * tn * o_b                    # double-buffered out tile
        w_tiles = 4 * D * tn                            # bf16 W strip, 2 buffers
        b_tiles = 8 * tn                                # f32 bias strip, 2 buffers
        interm = tm_ * D * 2 + tm_ * tn * 4             # bf16 x copy + f32 y
        return x_tiles + xres + o_tiles + w_tiles + b_tiles + interm + (2 << 20)

    # --- Row tile: big enough that each step moves >= ~target_step_bytes of
    # HBM traffic, capped by VMEM, and capped so the row axis has >= 2 grid
    # steps (v7x megacore) when rows allow.
    if row_block is None:
        bytes_per_row = D * (x_b + o_b)
        tm = _round_up(max(256, pl.cdiv(target_step_bytes, bytes_per_row)), sub)
        tm = min(tm, 4096)
    else:
        tm = _round_up(int(row_block), sub)
    if rows >= 512:
        tm = min(tm, _round_up(pl.cdiv(rows, 2), sub))
    while tm > sub and _vmem_bytes(tm) > budget:
        tm = max(sub, _round_up(tm // 2, sub))
    if tm >= rows:
        tm = rows  # single full-extent block (always a legal block shape)

    grid = (pl.cdiv(rows, tm), n_tiles)
    x2 = x.reshape(rows, D)

    in_specs = [pl.BlockSpec((tm, D), lambda i, j: (i, 0))]   # x rows (resident over j)
    args = [x2]
    if n_tiles > 1:
        in_specs.append(pl.BlockSpec((tm, tn), lambda i, j: (i, j)))  # residual cols
        args.append(x2)
    in_specs += [
        pl.BlockSpec((D, tn), lambda i, j: (0, j)),           # W strip / resident W
        pl.BlockSpec((1, tn), lambda i, j: (0, j)),           # bias strip
    ]
    args += [w_bf16, b_f32]

    w_traffic = 2 * D * D * (grid[0] if n_tiles > 1 else 1)
    cost = pl.CostEstimate(
        flops=2 * rows * D * D,
        transcendentals=0,
        bytes_accessed=int(rows * D * x_b * (2 if n_tiles > 1 else 1)
                           + rows * D * o_b + w_traffic + 4 * D),
    )

    out = pl.pallas_call(
        _make_kernel(n_tiles),
        out_shape=jax.ShapeDtypeStruct((rows, D), out_dtype),
        grid_spec=pltpu.PrefetchScalarGridSpec(
            num_scalar_prefetch=0,
            grid=grid,
            in_specs=in_specs,
            out_specs=pl.BlockSpec((tm, tn), lambda i, j: (i, j)),
        ),
        compiler_params=pltpu.CompilerParams(
            dimension_semantics=("parallel", "parallel"),
            vmem_limit_bytes=int(max(budget, _vmem_bytes(tm) + (4 << 20))),
        ),
        cost_estimate=cost,
    )(*args)

    return out.reshape(B, L, D)


def residual_linear_ref(x, w, b):
    """f32 reference: Residual(Linear) = fn(x) + x."""
    xf = x.astype(jnp.float32)
    y = xf @ w.astype(jnp.float32) + b.astype(jnp.float32)
    return (y + xf).astype(x.dtype)


if __name__ == "__main__":
    # Small shapes consistent with the module; dim kept lane-aligned (128).
    B, L, D = 2, 8, 128
    key = jax.random.PRNGKey(0)
    kx, kw, kb = jax.random.split(key, 3)

    x = jax.random.normal(kx, (B, L, D), dtype=jnp.float32)
    # Deterministic synthetic params for fn = Linear(dim, dim), stored so that
    # y = x @ w + b (i.e. w == torch weight.T).
    w = jax.random.normal(kw, (D, D), dtype=jnp.float32) / jnp.sqrt(D)
    b = jax.random.normal(kb, (D,), dtype=jnp.float32) * 0.01

    # One-time parameter casts, hoisted out of the per-call path.
    w_bf16 = w.astype(jnp.bfloat16)
    b_f32 = b.astype(jnp.float32)

    out = jax.block_until_ready(residual_linear(x, w_bf16, b_f32))
    ref = residual_linear_ref(x, w, b)
    assert out.shape == (B, L, D)
    # bf16 MXU matmul vs f32 reference -> loosened tolerance.
    assert jnp.allclose(out, ref, atol=2e-2, rtol=2e-2), "mismatch vs reference"

    # Ragged-rows path (rows % row tile != 0): handled by the grid directly,
    # no pad / slice HBM round trip.
    x_rag = jax.random.normal(kx, (3, 7, D), dtype=jnp.float32)
    out_rag = jax.block_until_ready(residual_linear(x_rag, w_bf16, b_f32, row_block=8))
    ref_rag = residual_linear_ref(x_rag, w, b)
    assert out_rag.shape == (3, 7, D)
    assert jnp.allclose(out_rag, ref_rag, atol=2e-2, rtol=2e-2), "ragged mismatch"

    # TODO(synk): Residual forwards arbitrary **kwargs and extra tuple outputs
    # of `fn` untouched; only the canonical single-output Linear fn is fused.
    print("KERNEL_OK")
</pallas_src>

<mosaic_0001>
module attributes {stable_mosaic.version = 11 : i64} {
  func.func @kernel(%arg0: i32, %arg1: i32, %arg2: memref<16x128xf32, #tpu.memory_space<vmem>>, %arg3: memref<128x128xbf16, #tpu.memory_space<vmem>>, %arg4: memref<1x128xf32, #tpu.memory_space<vmem>>, %arg5: memref<16x128xf32, #tpu.memory_space<vmem>>) attributes {dimension_semantics = [#tpu.dimension_semantics<parallel>, #tpu.dimension_semantics<parallel>], iteration_bounds = array<i64: 1, 1>, scalar_prefetch = 0 : i64, scratch_operands = 0 : i64, tpu.core_type = #tpu.core_type<tc>, window_params = [{transform_indices = @transform_0, window_bounds = array<i64: 16, 128>}, {transform_indices = @transform_1, window_bounds = array<i64: 128, 128>}, {transform_indices = @transform_2, window_bounds = array<i64: 1, 128>}, {transform_indices = @transform_3, window_bounds = array<i64: 16, 128>}]} {
    %c0 = arith.constant 0 : index
    %c0_0 = arith.constant 0 : index
    %0 = vector.load %arg2[%c0, %c0_0] : memref<16x128xf32, #tpu.memory_space<vmem>>, vector<16x128xf32>
    %1 = arith.truncf %0 : vector<16x128xf32> to vector<16x128xbf16>
    %c0_1 = arith.constant 0 : index
    %c0_2 = arith.constant 0 : index
    %2 = vector.load %arg3[%c0_1, %c0_2] : memref<128x128xbf16, #tpu.memory_space<vmem>>, vector<128x128xbf16>
    %cst = arith.constant dense<0.000000e+00> : vector<16x128xf32>
    %3 = tpu.matmul %1, %2, %cst {dimension_numbers = #tpu.dot_dimension_numbers<[1], [0], [0], [1], [0, 0, 1, 1], [], []>} : vector<16x128xbf16>, vector<128x128xbf16>, vector<16x128xf32> -> vector<16x128xf32>
    %c0_3 = arith.constant 0 : index
    %c0_4 = arith.constant 0 : index
    %4 = vector.load %arg4[%c0_3, %c0_4] : memref<1x128xf32, #tpu.memory_space<vmem>>, vector<1x128xf32>
    %5 = vector.broadcast %4 : vector<1x128xf32> to vector<16x128xf32>
    %6 = arith.addf %3, %5 : vector<16x128xf32>
    %7 = arith.addf %6, %0 : vector<16x128xf32>
    %c0_5 = arith.constant 0 : index
    %c0_6 = arith.constant 0 : index
    %8 = vector.load %arg5[%c0_5, %c0_6] : memref<16x128xf32, #tpu.memory_space<vmem>>, vector<16x128xf32>
    tpu.vector_store %arg5[%c0_5, %c0_6], %7 {strides = array<i32>} : memref<16x128xf32, #tpu.memory_space<vmem>>, vector<16x128xf32>,
    return
  }
  func.func @transform_0(%arg0: i32, %arg1: i32) -> (i32, i32) {
    %c0_i32 = arith.constant 0 : i32
    %c0_i32_0 = arith.constant 0 : i32
    return %arg0, %c0_i32 : i32, i32
  }
  func.func @transform_1(%arg0: i32, %arg1: i32) -> (i32, i32) {
    %c0_i32 = arith.constant 0 : i32
    %c0_i32_0 = arith.constant 0 : i32
    return %c0_i32, %arg1 : i32, i32
  }
  func.func @transform_2(%arg0: i32, %arg1: i32) -> (i32, i32) {
    %c0_i32 = arith.constant 0 : i32
    %c0_i32_0 = arith.constant 0 : i32
    return %c0_i32, %arg1 : i32, i32
  }
  func.func @transform_3(%arg0: i32, %arg1: i32) -> (i32, i32) {
    %c0_i32 = arith.constant 0 : i32
    return %arg0, %arg1 : i32, i32
  }
}

</mosaic_0001>

<llo_original>
// kernel: tpu_custom_call.1
$region0: #{tpu_custom_call.1}
  #allocation0 [shape = 'u32[]', space=smem, size = 0x4, offset = 0x4, fixed_abs, tag = 'smem constant byte address 0x4 - core index']
  #allocation1 [shape = 'u32[72,128]{1,0:T(1,128)}', space=vmem, size = 0x9000, scoped, tag = 'internal scratch']
  %s0 = inlined_call_operand.hbm [shape: f32[16,128], index: 0, kind: input, shape index: {}]
  %s1 = inlined_call_operand.hbm [shape: bf16[128,128], index: 1, kind: input, shape index: {}]
  %s2 = inlined_call_operand.vmem [shape: f32[1,128], index: 2, kind: input, shape index: {}]
  %s3 = inlined_call_operand.hbm [shape: f32[16,128], index: 3, kind: output, shape index: {}]
  %s4 = sld [smem:[#allocation0]]
  $region30: #{tpu_custom_call.1} parent=0
    _
  %s6 = ssub.s32 1, %s4
  %s7 = scalar_select 0, %s6, %s4
  $region1: #{tpu_custom_call.1} parent=0
    #allocation2 [shape = 'u8[8192]{0}', space=vmem, size = 0x2000, scoped, tag = 'input window, operand 0, single buffered']
    #allocation3 [shape = 's32[1]{0}', space=sflag, size = 0x4, scoped, tag = 'scoped memory for tpu_custom_call.1']
    #allocation4 [shape = 's32[1]{0}', space=sflag, size = 0x4, scoped, tag = 'scoped memory for tpu_custom_call.1']
    #allocation5 [shape = 'u8[32768]{0}', space=vmem, size = 0x8000, scoped, tag = 'input window, operand 1, single buffered']
    #allocation6 [shape = 's32[1]{0}', space=sflag, size = 0x4, scoped, tag = 'scoped memory for tpu_custom_call.1']
    #allocation7 [shape = 'u8[8192]{0}', space=vmem, size = 0x2000, scoped, tag = 'output window, operand 0, single buffered']
    %8 = vsyncpa [#allocation3], 0
    %9 = vsyncpa [#allocation6], 0
    %10 = vsyncpa [#allocation4], 0
    // Predicated region
    $region2: #{tpu_custom_call.1} parent=1 // pred_check
      _
    $region3: #{tpu_custom_call.1} parent=1 // pred_check_branch
      %12 = sbr.rel (0) target = $region5
    $region4: #{tpu_custom_call.1} parent=1 // pred_region
      %14 = vsyncadd [#allocation3], 0
      %s15 = sshll.u32 %s0, 4
      %s16 = int_to_ptr.hbm [resolvable:$true] %s15
      %s17 = sshll.u32 [#allocation2], 4
      %s18 = int_to_ptr.vmem [resolvable:$true] %s17
      %23 = dma.hbm_to_vmem [thread:$0]  %s16, 256, %s18, [#allocation3], 128, 128, 8
    $region5: #{tpu_custom_call.1} parent=1 // pred_fallthru
      _
    // Predicated region
    $region6: #{tpu_custom_call.1} parent=1 // pred_check
      _
    $region7: #{tpu_custom_call.1} parent=1 // pred_check_branch
      %25 = sbr.rel (0) target = $region9
    $region8: #{tpu_custom_call.1} parent=1 // pred_region
      %27 = vsyncadd [#allocation6], 0
      %s28 = sshll.u32 %s1, 4
      %s29 = int_to_ptr.hbm [resolvable:$true] %s28
      %s30 = sshll.u32 [#allocation5], 4
      %s31 = int_to_ptr.vmem [resolvable:$true] %s30
      %36 = dma.hbm_to_vmem [thread:$0]  %s29, 1024, %s31, [#allocation6], 64, 64, 4
    $region9: #{tpu_custom_call.1} parent=1 // pred_fallthru
      _
    // Predicated region
    $region10: #{tpu_custom_call.1} parent=1 // pred_check
      _
    $region11: #{tpu_custom_call.1} parent=1 // pred_check_branch
      %38 = sbr.rel (0) target = $region13
    $region12: #{tpu_custom_call.1} parent=1 // pred_region
      _
    $region13: #{tpu_custom_call.1} parent=1 // pred_fallthru
      _
    // Predicated region
    $region14: #{tpu_custom_call.1} parent=1 // pred_check
      _
    $region15: #{tpu_custom_call.1} parent=1 // pred_check_branch
      %40 = sbr.rel (0) target = $region17
    $region16: #{tpu_custom_call.1} parent=1 // pred_region
      %42 = dma.done [#allocation3], 256
    $region17: #{tpu_custom_call.1} parent=1 // pred_fallthru
      _
    // Predicated region
    $region18: #{tpu_custom_call.1} parent=1 // pred_check
      _
    $region19: #{tpu_custom_call.1} parent=1 // pred_check_branch
      %44 = sbr.rel (0) target = $region21
    $region20: #{tpu_custom_call.1} parent=1 // pred_region
      %46 = dma.done [#allocation6], 1024
    $region21: #{tpu_custom_call.1} parent=1 // pred_fallthru
      _
    %v47 = vld [vmem:[#allocation2] sm:$0xff]
    %v48 = vld [vmem:[#allocation2 + $0x8] sm:$0xff]
    %v49 = vpack.c.bf16 %v48, %v47
    %v50 = vld [vmem:[#allocation5] sm:$0xf]
    %v51 = vld [vmem:[#allocation5 + $0x4] sm:$0xf]
    %v52 = vld [vmem:[#allocation5 + $0x8] sm:$0xf]
    %v53 = vld [vmem:[#allocation5 + $0xc] sm:$0xf]
    %v54 = vld [vmem:[#allocation5 + $0x10] sm:$0xf]
    %v55 = vld [vmem:[#allocation5 + $0x14] sm:$0xf]
    %v56 = vld [vmem:[#allocation5 + $0x18] sm:$0xf]
    %v57 = vld [vmem:[#allocation5 + $0x1c] sm:$0xf]
    %v58 = vld [vmem:[#allocation5 + $0x20] sm:$0xf]
    %v59 = vld [vmem:[#allocation5 + $0x24] sm:$0xf]
    %v60 = vld [vmem:[#allocation5 + $0x28] sm:$0xf]
    %v61 = vld [vmem:[#allocation5 + $0x2c] sm:$0xf]
    %v62 = vld [vmem:[#allocation5 + $0x30] sm:$0xf]
    %v63 = vld [vmem:[#allocation5 + $0x34] sm:$0xf]
    %v64 = vld [vmem:[#allocation5 + $0x38] sm:$0xf]
    %v65 = vld [vmem:[#allocation5 + $0x3c] sm:$0xf]
    %v66 = vld [vmem:[%s2] sm:$0x1]
    %v68 = vperm.slane %v66, 0
    %v86 = vunpack.c.l.b16 %v50
    %v87 = vunpack.c.l.b16 %v51
    %v88 = vunpack.c.l.b16 %v52
    %v89 = vunpack.c.l.b16 %v53
    %v90 = vunpack.c.l.b16 %v54
    %v91 = vunpack.c.l.b16 %v55
    %v92 = vunpack.c.l.b16 %v56
    %v93 = vunpack.c.l.b16 %v57
    %v94 = vunpack.c.l.b16 %v58
    %v95 = vunpack.c.l.b16 %v59
    %v96 = vunpack.c.l.b16 %v60
    %v97 = vunpack.c.l.b16 %v61
    %v98 = vunpack.c.l.b16 %v62
    %v99 = vunpack.c.l.b16 %v63
    %v100 = vunpack.c.l.b16 %v64
    %v101 = vunpack.c.l.b16 %v65
    %v102 = vpack.c.b16 %v87, %v86
    %v103 = vpack.c.b16 %v89, %v88
    %v104 = vpack.c.b16 %v91, %v90
    %v105 = vpack.c.b16 %v93, %v92
    %v106 = vpack.c.b16 %v95, %v94
    %v107 = vpack.c.b16 %v97, %v96
    %v108 = vpack.c.b16 %v99, %v98
    %v109 = vpack.c.b16 %v101, %v100
    %118 = vmatpush.bf16.msra.mxu0 %v109
    %119 = vmatpush.bf16.msra.mxu0 %v108
    %120 = vmatpush.bf16.msra.mxu0 %v107
    %121 = vmatpush.bf16.msra.mxu0 %v106
    %122 = vmatpush.bf16.msra.mxu0 %v105
    %123 = vmatpush.bf16.msra.mxu0 %v104
    %124 = vmatpush.bf16.msra.mxu0 %v103
    %125 = vmatpush.bf16.msra.mxu0 %v102
    %126 = vmatmul.bf16.gmra.mxu0 %v49
    %v127 = vpop.f32.mrf.mxu0
    %v128 = vadd.f32 %v68, %v127
    %v129 = vpop.f32.mrf.mxu0
    %v130 = vadd.f32 %v68, %v129
    %131 = vdwg.mxu0
    %v132 = vadd.f32 %v128, %v47
    %v133 = vadd.f32 %v130, %v48
    %134 = vst [vmem:[#allocation7] sm:$0xff] %v132
    %135 = vst [vmem:[#allocation7 + $0x8] sm:$0xff] %v133
    // Predicated region
    $region22: #{tpu_custom_call.1} parent=1 // pred_check
      _
    $region23: #{tpu_custom_call.1} parent=1 // pred_check_branch
      %137 = sbr.rel (0) target = $region25
    $region24: #{tpu_custom_call.1} parent=1 // pred_region
      %139 = vsyncadd [#allocation4], 0
      %s140 = sshll.u32 [#allocation7], 4
      %s141 = int_to_ptr.vmem [resolvable:$true] %s140
      %s142 = sshll.u32 %s3, 4
      %s143 = int_to_ptr.hbm [resolvable:$true] %s142
      %148 = dma.vmem_to_hbm [thread:$0]  %s141, 256, %s143, [#allocation4], 128, 128, 8
    $region25: #{tpu_custom_call.1} parent=1 // pred_fallthru
      _
    // Predicated region
    $region26: #{tpu_custom_call.1} parent=1 // pred_check
      _
    $region27: #{tpu_custom_call.1} parent=1 // pred_check_branch
      %150 = sbr.rel (0) target = $region29
    $region28: #{tpu_custom_call.1} parent=1 // pred_region
      %152 = dma.done [#allocation4], 256
    $region29: #{tpu_custom_call.1} parent=1 // pred_fallthru
      _
    %153 = vsyncpa [#allocation3], 1
    %154 = vsyncpa [#allocation6], 1
    %155 = vsyncpa [#allocation4], 1

</llo_original>
